<compile_context>
chip_gen: v7x
topology: tpu7x:2x2x1
jax: 0.10.0
libtpu: 0.0.40
codegen_flags: <defaults>
</compile_context>

<pallas_src>
import functools

import jax
import jax.numpy as jnp
from jax.experimental import pallas as pl
from jax.experimental.pallas import tpu as pltpu

_LANE = 128
_SUBLANE = 8


def _round_up(x, m):
    return (x + m - 1) // m * m


def _fc_kernel(x_ref, w_ref, b_ref, out1_ref, out3_ref, *, inv_hw):
    # x_ref: (TN, HW, C) NHWC-flattened feature tile; C is on the lane axis.
    x = x_ref[...]
    # AdaptiveAvgPool2d((1,1)) + flatten(1) -> (TN, C). Sum along the sublane
    # (spatial) axis with f32 accumulation (no full f32 copy of a bf16 tile).
    pooled = jnp.sum(x, axis=1, dtype=jnp.float32) * inv_hw
    out1_ref[...] = pooled.astype(out1_ref.dtype)
    # fc_4: pooled (TN, C) @ W (C, NCP) on the MXU, plus bias. NCP is the
    # lane-padded class dim (multiple of 128); padding sliced off outside.
    logits = jnp.dot(pooled, w_ref[...].astype(jnp.float32),
                     preferred_element_type=jnp.float32)
    logits = logits + b_ref[...].astype(jnp.float32)
    out3_ref[...] = logits.astype(out3_ref.dtype)


def _pick_tile_n(n, hw, c, itemsize, target_bytes=14 << 20):
    """Batch-tile so 2 double-buffered x tiles stay well inside scoped VMEM."""
    row_bytes = _round_up(hw, _SUBLANE) * _round_up(c, _LANE) * itemsize
    tn = max(1, target_bytes // row_bytes)
    tn = max(_SUBLANE, (tn // _SUBLANE) * _SUBLANE)
    return n if tn >= n else tn


@jax.jit
def fully_connected_forward(x_nchw, fc_w, fc_b):
    """x_nchw: (N, C, H, W) feature map from the backbone trunk
       fc_w:   (num_classes, C) fc_4.weight
       fc_b:   (num_classes,)   fc_4.bias
       returns (out_1: (N, C), out_3: (N, num_classes))"""
    n, c, h, w_sp = x_nchw.shape
    hw = h * w_sp
    num_classes = fc_w.shape[0]
    ncp = _round_up(num_classes, _LANE)
    dtype = x_nchw.dtype
    itemsize = jnp.dtype(dtype).itemsize

    # One-time layout change: NCHW -> (N, HW, C) so C rides the lanes.
    x_nhwc = jnp.transpose(x_nchw, (0, 2, 3, 1)).reshape(n, hw, c)

    # Lane-pad weight / bias so the out3 store is lane-dense.
    w_t = jnp.zeros((c, ncp), jnp.float32).at[:, :num_classes].set(
        fc_w.T.astype(jnp.float32))
    b_p = jnp.zeros((1, ncp), jnp.float32).at[:, :num_classes].set(
        fc_b.astype(jnp.float32))

    tn = _pick_tile_n(n, hw, c, itemsize)
    grid = (pl.cdiv(n, tn),)

    cost = pl.CostEstimate(
        flops=n * hw * c + 2 * n * c * num_classes,
        transcendentals=0,
        bytes_accessed=(x_nhwc.size * itemsize
                        + w_t.size * 4 + b_p.size * 4
                        + n * c * itemsize + n * ncp * itemsize),
    )

    out1, out3_p = pl.pallas_call(
        functools.partial(_fc_kernel, inv_hw=1.0 / float(hw)),
        out_shape=(
            jax.ShapeDtypeStruct((n, c), dtype),
            jax.ShapeDtypeStruct((n, ncp), dtype),
        ),
        grid=grid,
        in_specs=[
            pl.BlockSpec((tn, hw, c), lambda i: (i, 0, 0)),   # x: tiled over N
            pl.BlockSpec((c, ncp), lambda i: (0, 0)),         # W: resident
            pl.BlockSpec((1, ncp), lambda i: (0, 0)),         # b: resident
        ],
        out_specs=(
            pl.BlockSpec((tn, c), lambda i: (i, 0)),
            pl.BlockSpec((tn, ncp), lambda i: (i, 0)),
        ),
        compiler_params=pltpu.CompilerParams(
            dimension_semantics=("parallel",),
            vmem_limit_bytes=48 << 20,
        ),
        cost_estimate=cost,
    )(x_nhwc, w_t, b_p)

    return out1, out3_p[:, :num_classes]


def _reference(x_nchw, fc_w, fc_b):
    pooled = jnp.mean(x_nchw, axis=(2, 3))
    return pooled, pooled @ fc_w.T + fc_b


if __name__ == "__main__":
    # Small, module-consistent shapes:
    #   batch N=2, num_ftrs C=32 (stand-in for DenseNet121's 1024),
    #   spatial H=W=16, num_classes=8 (stand-in for 30).
    N, C, H, W, NUM_CLASSES = 2, 32, 16, 16, 8

    key = jax.random.PRNGKey(0)
    kx, kw, kb = jax.random.split(key, 3)

    x = jax.random.normal(kx, (N, C, H, W), dtype=jnp.float32)

    # nn.Linear-style init: U(-1/sqrt(in), 1/sqrt(in)).
    bound = 1.0 / float(C) ** 0.5
    fc_w = jax.random.uniform(kw, (NUM_CLASSES, C), jnp.float32,
                              minval=-bound, maxval=bound)   # fc_4.weight
    fc_b = jax.random.uniform(kb, (NUM_CLASSES,), jnp.float32,
                              minval=-bound, maxval=bound)   # fc_4.bias

    out_1, out_3 = fully_connected_forward(x, fc_w, fc_b)
    jax.block_until_ready((out_1, out_3))

    ref_1, ref_3 = _reference(x, fc_w, fc_b)
    assert out_1.shape == (N, C) and out_3.shape == (N, NUM_CLASSES)
    assert jnp.allclose(out_1, ref_1, atol=1e-5, rtol=1e-5)
    assert jnp.allclose(out_3, ref_3, atol=1e-5, rtol=1e-5)

    print("KERNEL_OK")
</pallas_src>

<mosaic_0001>
module attributes {stable_mosaic.version = 11 : i64} {
  func.func @_fc_kernel(%arg0: i32, %arg1: memref<2x256x32xf32, #tpu.memory_space<vmem>>, %arg2: memref<32x128xf32, #tpu.memory_space<vmem>>, %arg3: memref<1x128xf32, #tpu.memory_space<vmem>>, %arg4: memref<2x32xf32, #tpu.memory_space<vmem>>, %arg5: memref<2x128xf32, #tpu.memory_space<vmem>>) attributes {dimension_semantics = [#tpu.dimension_semantics<parallel>], iteration_bounds = array<i64: 1>, scalar_prefetch = 0 : i64, scratch_operands = 0 : i64, tpu.core_type = #tpu.core_type<tc>, window_params = [{transform_indices = @transform_0, window_bounds = array<i64: 2, 256, 32>}, {pipeline_mode = #tpu.pipeline_mode<synchronous>, transform_indices = @transform_1, window_bounds = array<i64: 32, 128>}, {pipeline_mode = #tpu.pipeline_mode<synchronous>, transform_indices = @transform_2, window_bounds = array<i64: 1, 128>}, {transform_indices = @transform_3, window_bounds = array<i64: 2, 32>}, {transform_indices = @transform_4, window_bounds = array<i64: 2, 128>}]} {
    %c0 = arith.constant 0 : index
    %c0_0 = arith.constant 0 : index
    %c0_1 = arith.constant 0 : index
    %0 = vector.load %arg1[%c0, %c0_0, %c0_1] : memref<2x256x32xf32, #tpu.memory_space<vmem>>, vector<2x256x32xf32>
    %cst = arith.constant dense<0.000000e+00> : vector<2x32xf32>
    %1 = vector.multi_reduction <add>, %0, %cst [1] : vector<2x256x32xf32> to vector<2x32xf32>
    %cst_2 = arith.constant 3.906250e-03 : f32
    %2 = vector.broadcast %cst_2 : f32 to vector<2x32xf32>
    %3 = arith.mulf %1, %2 : vector<2x32xf32>
    %c0_3 = arith.constant 0 : index
    %c0_4 = arith.constant 0 : index
    %4 = vector.load %arg4[%c0_3, %c0_4] : memref<2x32xf32, #tpu.memory_space<vmem>>, vector<2x32xf32>
    tpu.vector_store %arg4[%c0_3, %c0_4], %3 {strides = array<i32>} : memref<2x32xf32, #tpu.memory_space<vmem>>, vector<2x32xf32>,
    %c0_5 = arith.constant 0 : index
    %c0_6 = arith.constant 0 : index
    %5 = vector.load %arg2[%c0_5, %c0_6] : memref<32x128xf32, #tpu.memory_space<vmem>>, vector<32x128xf32>
    %cst_7 = arith.constant dense<0.000000e+00> : vector<2x128xf32>
    %6 = tpu.matmul %3, %5, %cst_7 {dimension_numbers = #tpu.dot_dimension_numbers<[1], [0], [0], [1], [0, 0, 1, 1], [], []>} : vector<2x32xf32>, vector<32x128xf32>, vector<2x128xf32> -> vector<2x128xf32>
    %c0_8 = arith.constant 0 : index
    %c0_9 = arith.constant 0 : index
    %7 = vector.load %arg3[%c0_8, %c0_9] : memref<1x128xf32, #tpu.memory_space<vmem>>, vector<1x128xf32>
    %8 = vector.broadcast %7 : vector<1x128xf32> to vector<2x128xf32>
    %9 = arith.addf %6, %8 : vector<2x128xf32>
    %c0_10 = arith.constant 0 : index
    %c0_11 = arith.constant 0 : index
    %10 = vector.load %arg5[%c0_10, %c0_11] : memref<2x128xf32, #tpu.memory_space<vmem>>, vector<2x128xf32>
    tpu.vector_store %arg5[%c0_10, %c0_11], %9 {strides = array<i32>} : memref<2x128xf32, #tpu.memory_space<vmem>>, vector<2x128xf32>,
    return
  }
  func.func @transform_0(%arg0: i32) -> (i32, i32, i32) {
    %c0_i32 = arith.constant 0 : i32
    %c0_i32_0 = arith.constant 0 : i32
    %c0_i32_1 = arith.constant 0 : i32
    return %arg0, %c0_i32, %c0_i32_0 : i32, i32, i32
  }
  func.func @transform_1(%arg0: i32) -> (i32, i32) {
    %c0_i32 = arith.constant 0 : i32
    %c0_i32_0 = arith.constant 0 : i32
    %c0_i32_1 = arith.constant 0 : i32
    return %c0_i32, %c0_i32_0 : i32, i32
  }
  func.func @transform_2(%arg0: i32) -> (i32, i32) {
    %c0_i32 = arith.constant 0 : i32
    %c0_i32_0 = arith.constant 0 : i32
    %c0_i32_1 = arith.constant 0 : i32
    return %c0_i32, %c0_i32_0 : i32, i32
  }
  func.func @transform_3(%arg0: i32) -> (i32, i32) {
    %c0_i32 = arith.constant 0 : i32
    %c0_i32_0 = arith.constant 0 : i32
    return %arg0, %c0_i32 : i32, i32
  }
  func.func @transform_4(%arg0: i32) -> (i32, i32) {
    %c0_i32 = arith.constant 0 : i32
    %c0_i32_0 = arith.constant 0 : i32
    return %arg0, %c0_i32 : i32, i32
  }
}

</mosaic_0001>

<llo_original>
// kernel: fully_connected_forward.1
$region0: #{fully_connected_forward.1}
  #allocation0 [shape = 'u32[]', space=smem, size = 0x4, offset = 0x4, fixed_abs, tag = 'smem constant byte address 0x4 - core index']
  #allocation1 [shape = 'u32[144,128]{1,0:T(1,128)}', space=vmem, size = 0x12000, scoped, tag = 'internal scratch']
  %s0 = inlined_call_operand.hbm [shape: f32[2,256,32], index: 0, kind: input, shape index: {}]
  %s1 = inlined_call_operand.vmem [shape: f32[32,128], index: 1, kind: input, shape index: {}]
  %s2 = inlined_call_operand.vmem [shape: f32[1,128], index: 2, kind: input, shape index: {}]
  %s3 = inlined_call_operand.hbm [shape: f32[2,32], index: 3, kind: output, shape index: {0}]
  %s4 = inlined_call_operand.hbm [shape: f32[2,128], index: 4, kind: output, shape index: {1}]
  %5 = xla_tuple %s3, %s4
  %s6 = sld [smem:[#allocation0]]
  $region34: #{fully_connected_forward.1} parent=0
    _
  %s8 = ssub.s32 1, %s6
  %s9 = scalar_select 0, %s8, %s6
  $region1: #{fully_connected_forward.1} parent=0
    #allocation2 [shape = 'u8[262144]{0}', space=vmem, size = 0x40000, scoped, tag = 'input window, operand 0, single buffered']
    #allocation3 [shape = 's32[1]{0}', space=sflag, size = 0x4, scoped, tag = 'scoped memory for fully_connected_forward.1']
    #allocation4 [shape = 's32[1]{0}', space=sflag, size = 0x4, scoped, tag = 'scoped memory for fully_connected_forward.1']
    #allocation5 [shape = 'u8[1024]{0}', space=vmem, size = 0x400, scoped, tag = 'output window, operand 0, single buffered']
    #allocation6 [shape = 'u8[1024]{0}', space=vmem, size = 0x400, scoped, tag = 'output window, operand 1, single buffered']
    #allocation7 [shape = 's32[1]{0}', space=sflag, size = 0x4, scoped, tag = 'scoped memory for fully_connected_forward.1']
    %10 = vsyncpa [#allocation3], 0
    %11 = vsyncpa [#allocation4], 0
    %12 = vsyncpa [#allocation7], 0
    // Predicated region
    $region2: #{fully_connected_forward.1} parent=1 // pred_check
      _
    $region3: #{fully_connected_forward.1} parent=1 // pred_check_branch
      %14 = sbr.rel (0) target = $region5
    $region4: #{fully_connected_forward.1} parent=1 // pred_region
      %s16 = ssub.s32 8192, 8192
      %17 = vsyncadd [#allocation3], %s16
      %s18 = sshll.u32 [#allocation2], 4
      %s19 = int_to_ptr.vmem [resolvable:$true] %s18
      %24 = dma.hbm_to_vmem [thread:$0]  %s0, 8192, %s19, [#allocation3], 128, 128, 8
    $region5: #{fully_connected_forward.1} parent=1 // pred_fallthru
      _
    // Predicated region
    $region6: #{fully_connected_forward.1} parent=1 // pred_check
      _
    $region7: #{fully_connected_forward.1} parent=1 // pred_check_branch
      %26 = sbr.rel (0) target = $region9
    $region8: #{fully_connected_forward.1} parent=1 // pred_region
      _
    $region9: #{fully_connected_forward.1} parent=1 // pred_fallthru
      _
    // Predicated region
    $region10: #{fully_connected_forward.1} parent=1 // pred_check
      _
    $region11: #{fully_connected_forward.1} parent=1 // pred_check_branch
      %28 = sbr.rel (0) target = $region13
    $region12: #{fully_connected_forward.1} parent=1 // pred_region
      _
    $region13: #{fully_connected_forward.1} parent=1 // pred_fallthru
      _
    // Predicated region
    $region14: #{fully_connected_forward.1} parent=1 // pred_check
      _
    $region15: #{fully_connected_forward.1} parent=1 // pred_check_branch
      %30 = sbr.rel (0) target = $region17
    $region16: #{fully_connected_forward.1} parent=1 // pred_region
      %31 = dma.done [#allocation3], 8192
    $region17: #{fully_connected_forward.1} parent=1 // pred_fallthru
      _
    %v32 = vld [vmem:[#allocation2] sm:$0xff]
    %v33 = vld [vmem:[#allocation2 + $0x8] sm:$0xff]
    %v34 = vld [vmem:[#allocation2 + $0x10] sm:$0xff]
    %v35 = vld [vmem:[#allocation2 + $0x18] sm:$0xff]
    %v36 = vld [vmem:[#allocation2 + $0x20] sm:$0xff]
    %v37 = vld [vmem:[#allocation2 + $0x28] sm:$0xff]
    %v38 = vld [vmem:[#allocation2 + $0x30] sm:$0xff]
    %v39 = vld [vmem:[#allocation2 + $0x38] sm:$0xff]
    %v40 = vld [vmem:[#allocation2 + $0x40] sm:$0xff]
    %v41 = vld [vmem:[#allocation2 + $0x48] sm:$0xff]
    %v42 = vld [vmem:[#allocation2 + $0x50] sm:$0xff]
    %v43 = vld [vmem:[#allocation2 + $0x58] sm:$0xff]
    %v44 = vld [vmem:[#allocation2 + $0x60] sm:$0xff]
    %v45 = vld [vmem:[#allocation2 + $0x68] sm:$0xff]
    %v46 = vld [vmem:[#allocation2 + $0x70] sm:$0xff]
    %v47 = vld [vmem:[#allocation2 + $0x78] sm:$0xff]
    %v48 = vld [vmem:[#allocation2 + $0x80] sm:$0xff]
    %v49 = vld [vmem:[#allocation2 + $0x88] sm:$0xff]
    %v50 = vld [vmem:[#allocation2 + $0x90] sm:$0xff]
    %v51 = vld [vmem:[#allocation2 + $0x98] sm:$0xff]
    %v52 = vld [vmem:[#allocation2 + $0xa0] sm:$0xff]
    %v53 = vld [vmem:[#allocation2 + $0xa8] sm:$0xff]
    %v54 = vld [vmem:[#allocation2 + $0xb0] sm:$0xff]
    %v55 = vld [vmem:[#allocation2 + $0xb8] sm:$0xff]
    %v56 = vld [vmem:[#allocation2 + $0xc0] sm:$0xff]
    %v57 = vld [vmem:[#allocation2 + $0xc8] sm:$0xff]
    %v58 = vld [vmem:[#allocation2 + $0xd0] sm:$0xff]
    %v59 = vld [vmem:[#allocation2 + $0xd8] sm:$0xff]
    %v60 = vld [vmem:[#allocation2 + $0xe0] sm:$0xff]
    %v61 = vld [vmem:[#allocation2 + $0xe8] sm:$0xff]
    %v62 = vld [vmem:[#allocation2 + $0xf0] sm:$0xff]
    %v63 = vld [vmem:[#allocation2 + $0xf8] sm:$0xff]
    %v64 = vld [vmem:[#allocation2 + $0x100] sm:$0xff]
    %v65 = vld [vmem:[#allocation2 + $0x108] sm:$0xff]
    %v66 = vld [vmem:[#allocation2 + $0x110] sm:$0xff]
    %v67 = vld [vmem:[#allocation2 + $0x118] sm:$0xff]
    %v68 = vld [vmem:[#allocation2 + $0x120] sm:$0xff]
    %v69 = vld [vmem:[#allocation2 + $0x128] sm:$0xff]
    %v70 = vld [vmem:[#allocation2 + $0x130] sm:$0xff]
    %v71 = vld [vmem:[#allocation2 + $0x138] sm:$0xff]
    %v72 = vld [vmem:[#allocation2 + $0x140] sm:$0xff]
    %v73 = vld [vmem:[#allocation2 + $0x148] sm:$0xff]
    %v74 = vld [vmem:[#allocation2 + $0x150] sm:$0xff]
    %v75 = vld [vmem:[#allocation2 + $0x158] sm:$0xff]
    %v76 = vld [vmem:[#allocation2 + $0x160] sm:$0xff]
    %v77 = vld [vmem:[#allocation2 + $0x168] sm:$0xff]
    %v78 = vld [vmem:[#allocation2 + $0x170] sm:$0xff]
    %v79 = vld [vmem:[#allocation2 + $0x178] sm:$0xff]
    %v80 = vld [vmem:[#allocation2 + $0x180] sm:$0xff]
    %v81 = vld [vmem:[#allocation2 + $0x188] sm:$0xff]
    %v82 = vld [vmem:[#allocation2 + $0x190] sm:$0xff]
    %v83 = vld [vmem:[#allocation2 + $0x198] sm:$0xff]
    %v84 = vld [vmem:[#allocation2 + $0x1a0] sm:$0xff]
    %v85 = vld [vmem:[#allocation2 + $0x1a8] sm:$0xff]
    %v86 = vld [vmem:[#allocation2 + $0x1b0] sm:$0xff]
    %v87 = vld [vmem:[#allocation2 + $0x1b8] sm:$0xff]
    %v88 = vld [vmem:[#allocation2 + $0x1c0] sm:$0xff]
    %v89 = vld [vmem:[#allocation2 + $0x1c8] sm:$0xff]
    %v90 = vld [vmem:[#allocation2 + $0x1d0] sm:$0xff]
    %v91 = vld [vmem:[#allocation2 + $0x1d8] sm:$0xff]
    %v92 = vld [vmem:[#allocation2 + $0x1e0] sm:$0xff]
    %v93 = vld [vmem:[#allocation2 + $0x1e8] sm:$0xff]
    %v94 = vld [vmem:[#allocation2 + $0x1f0] sm:$0xff]
    %v95 = vld [vmem:[#allocation2 + $0x1f8] sm:$0xff]
    %vm96 = vcmask 261120
    %v97 = vsel %vm96, %v32, 0.0
    %v98 = vsel %vm96, %v33, 0.0
    %v99 = vadd.f32 %v97, %v98
    %v100 = vsel %vm96, %v34, 0.0
    %v101 = vadd.f32 %v99, %v100
    %v102 = vsel %vm96, %v35, 0.0
    %v103 = vadd.f32 %v101, %v102
    %v104 = vsel %vm96, %v36, 0.0
    %v105 = vadd.f32 %v103, %v104
    %v106 = vsel %vm96, %v37, 0.0
    %v107 = vadd.f32 %v105, %v106
    %v108 = vsel %vm96, %v38, 0.0
    %v109 = vadd.f32 %v107, %v108
    %v110 = vsel %vm96, %v39, 0.0
    %v111 = vadd.f32 %v109, %v110
    %v112 = vsel %vm96, %v40, 0.0
    %v113 = vadd.f32 %v111, %v112
    %v114 = vsel %vm96, %v41, 0.0
    %v115 = vadd.f32 %v113, %v114
    %v116 = vsel %vm96, %v42, 0.0
    %v117 = vadd.f32 %v115, %v116
    %v118 = vsel %vm96, %v43, 0.0
    %v119 = vadd.f32 %v117, %v118
    %v120 = vsel %vm96, %v44, 0.0
    %v121 = vadd.f32 %v119, %v120
    %v122 = vsel %vm96, %v45, 0.0
    %v123 = vadd.f32 %v121, %v122
    %v124 = vsel %vm96, %v46, 0.0
    %v125 = vadd.f32 %v123, %v124
    %v126 = vsel %vm96, %v47, 0.0
    %v127 = vadd.f32 %v125, %v126
    %v128 = vsel %vm96, %v48, 0.0
    %v129 = vadd.f32 %v127, %v128
    %v130 = vsel %vm96, %v49, 0.0
    %v131 = vadd.f32 %v129, %v130
    %v132 = vsel %vm96, %v50, 0.0
    %v133 = vadd.f32 %v131, %v132
    %v134 = vsel %vm96, %v51, 0.0
    %v135 = vadd.f32 %v133, %v134
    %v136 = vsel %vm96, %v52, 0.0
    %v137 = vadd.f32 %v135, %v136
    %v138 = vsel %vm96, %v53, 0.0
    %v139 = vadd.f32 %v137, %v138
    %v140 = vsel %vm96, %v54, 0.0
    %v141 = vadd.f32 %v139, %v140
    %v142 = vsel %vm96, %v55, 0.0
    %v143 = vadd.f32 %v141, %v142
    %v144 = vsel %vm96, %v56, 0.0
    %v145 = vadd.f32 %v143, %v144
    %v146 = vsel %vm96, %v57, 0.0
    %v147 = vadd.f32 %v145, %v146
    %v148 = vsel %vm96, %v58, 0.0
    %v149 = vadd.f32 %v147, %v148
    %v150 = vsel %vm96, %v59, 0.0
    %v151 = vadd.f32 %v149, %v150
    %v152 = vsel %vm96, %v60, 0.0
    %v153 = vadd.f32 %v151, %v152
    %v154 = vsel %vm96, %v61, 0.0
    %v155 = vadd.f32 %v153, %v154
    %v156 = vsel %vm96, %v62, 0.0
    %v157 = vadd.f32 %v155, %v156
    %v158 = vsel %vm96, %v63, 0.0
    %v159 = vadd.f32 %v157, %v158
    %v160 = vrot.slane %v159, 4
    %v161 = vadd.f32 %v159, %v160
    %v162 = vrot.slane %v161, 2
    %v163 = vadd.f32 %v161, %v162
    %v164 = vrot.slane %v163, 1
    %v165 = vadd.f32 %v163, %v164
    %v166 = vsel %vm96, %v64, 0.0
    %v167 = vsel %vm96, %v65, 0.0
    %v168 = vadd.f32 %v166, %v167
    %v169 = vsel %vm96, %v66, 0.0
    %v170 = vadd.f32 %v168, %v169
    %v171 = vsel %vm96, %v67, 0.0
    %v172 = vadd.f32 %v170, %v171
    %v173 = vsel %vm96, %v68, 0.0
    %v174 = vadd.f32 %v172, %v173
    %v175 = vsel %vm96, %v69, 0.0
    %v176 = vadd.f32 %v174, %v175
    %v177 = vsel %vm96, %v70, 0.0
    %v178 = vadd.f32 %v176, %v177
    %v179 = vsel %vm96, %v71, 0.0
    %v180 = vadd.f32 %v178, %v179
    %v181 = vsel %vm96, %v72, 0.0
    %v182 = vadd.f32 %v180, %v181
    %v183 = vsel %vm96, %v73, 0.0
    %v184 = vadd.f32 %v182, %v183
    %v185 = vsel %vm96, %v74, 0.0
    %v186 = vadd.f32 %v184, %v185
    %v187 = vsel %vm96, %v75, 0.0
    %v188 = vadd.f32 %v186, %v187
    %v189 = vsel %vm96, %v76, 0.0
    %v190 = vadd.f32 %v188, %v189
    %v191 = vsel %vm96, %v77, 0.0
    %v192 = vadd.f32 %v190, %v191
    %v193 = vsel %vm96, %v78, 0.0
    %v194 = vadd.f32 %v192, %v193
    %v195 = vsel %vm96, %v79, 0.0
    %v196 = vadd.f32 %v194, %v195
    %v197 = vsel %vm96, %v80, 0.0
    %v198 = vadd.f32 %v196, %v197
    %v199 = vsel %vm96, %v81, 0.0
    %v200 = vadd.f32 %v198, %v199
    %v201 = vsel %vm96, %v82, 0.0
    %v202 = vadd.f32 %v200, %v201
    %v203 = vsel %vm96, %v83, 0.0
    %v204 = vadd.f32 %v202, %v203
    %v205 = vsel %vm96, %v84, 0.0
    %v206 = vadd.f32 %v204, %v205
    %v207 = vsel %vm96, %v85, 0.0
    %v208 = vadd.f32 %v206, %v207
    %v209 = vsel %vm96, %v86, 0.0
    %v210 = vadd.f32 %v208, %v209
    %v211 = vsel %vm96, %v87, 0.0
    %v212 = vadd.f32 %v210, %v211
    %v213 = vsel %vm96, %v88, 0.0
    %v214 = vadd.f32 %v212, %v213
    %v215 = vsel %vm96, %v89, 0.0
    %v216 = vadd.f32 %v214, %v215
    %v217 = vsel %vm96, %v90, 0.0
    %v218 = vadd.f32 %v216, %v217
    %v219 = vsel %vm96, %v91, 0.0
    %v220 = vadd.f32 %v218, %v219
    %v221 = vsel %vm96, %v92, 0.0
    %v222 = vadd.f32 %v220, %v221
    %v223 = vsel %vm96, %v93, 0.0
    %v224 = vadd.f32 %v222, %v223
    %v225 = vsel %vm96, %v94, 0.0
    %v226 = vadd.f32 %v224, %v225
    %v227 = vsel %vm96, %v95, 0.0
    %v228 = vadd.f32 %v226, %v227
    %v229 = vrot.slane %v228, 4
    %v230 = vadd.f32 %v228, %v229
    %v231 = vrot.slane %v230, 2
    %v232 = vadd.f32 %v230, %v231
    %v233 = vrot.slane %v232, 1
    %v234 = vadd.f32 %v232, %v233
    %v235 = vmul.f32 %v165, 0.00390625
    %v236 = vmul.f32 %v234, 0.00390625
    %vm239 = vcmask 1041409
    %v240 = vsel %vm239, %v236, %v235
    %vm242 = vcmask 254976
    %243 = vst.msk [vmem:[#allocation5] sm:$0x3] %vm242, %v240
    %v244 = vld [vmem:[%s1] sm:$0xff]
    %v245 = vld [vmem:[%s1 + $0x8] sm:$0xff]
    %v246 = vld [vmem:[%s1 + $0x10] sm:$0xff]
    %v247 = vld [vmem:[%s1 + $0x18] sm:$0xff]
    %v248 = vld [vmem:[%s2] sm:$0x1]
    %v250 = vlaneseq
    %v251 = vshrl.u32 %v250, 7
    %v252 = vsub.s32 0, %v251
    %v253 = vrot.slane %v248, %v252
    %v255 = vsel %vm96, %v240, 0
    %257 = vmatprep.subr.mxu0 0.0
    %258 = vmatpush1.msra.mxu0 %v244
    %259 = vmatprep.subr.mxu0 0.0
    %260 = vmatpush1.msra.mxu0 %v245
    %261 = vmatprep.subr.mxu0 0.0
    %262 = vmatpush1.msra.mxu0 %v246
    %263 = vmatprep.subr.mxu0 0.0
    %264 = vmatpush1.msra.mxu0 %v247
    %265 = vmatprep.subr.mxu0 0.0
    %266 = vmatpush1.msra.mxu0 0.0
    %267 = vmatprep.subr.mxu0 0.0
    %268 = vmatpush1.msra.mxu0 0.0
    %269 = vmatprep.subr.mxu0 0.0
    %270 = vmatpush1.msra.mxu0 0.0
    %271 = vmatprep.subr.mxu0 0.0
    %272 = vmatpush1.msra.mxu0 0.0
    %273 = vmatprep.subr.mxu0 0.0
    %274 = vmatpush1.msra.mxu0 0.0
    %275 = vmatprep.subr.mxu0 0.0
    %276 = vmatpush1.msra.mxu0 0.0
    %277 = vmatprep.subr.mxu0 0.0
    %278 = vmatpush1.msra.mxu0 0.0
    %279 = vmatprep.subr.mxu0 0.0
    %280 = vmatpush1.msra.mxu0 0.0
    %281 = vmatprep.subr.mxu0 0.0
    %282 = vmatpush1.msra.mxu0 0.0
    %283 = vmatprep.subr.mxu0 0.0
    %284 = vmatpush1.msra.mxu0 0.0
    %285 = vmatprep.subr.mxu0 0.0
    %286 = vmatpush1.msra.mxu0 0.0
    %287 = vmatprep.subr.mxu0 0.0
    %288 = vmatpush1.msra.mxu0 0.0
    %289 = vmatprep.subr.mxu0 0.0
    %290 = vmatpush1.msra.mxu0 0.0
    %291 = vmatprep.subr.mxu0 0.0
    %292 = vmatpush1.msra.mxu0 0.0
    %293 = vmatprep.subr.mxu0 0.0
    %294 = vmatpush1.msra.mxu0 0.0
    %295 = vmatprep.subr.mxu0 0.0
    %296 = vmatpush1.msra.mxu0 0.0
    %297 = vmatprep.subr.mxu0 0.0
    %298 = vmatpush1.msra.mxu0 0.0
    %299 = vmatprep.subr.mxu0 0.0
    %300 = vmatpush1.msra.mxu0 0.0
    %301 = vmatprep.subr.mxu0 0.0
    %302 = vmatpush1.msra.mxu0 0.0
    %303 = vmatprep.subr.mxu0 0.0
    %304 = vmatpush1.msra.mxu0 0.0
    %305 = vmatprep.subr.mxu0 0.0
    %306 = vmatpush1.msra.mxu0 0.0
    %307 = vmatprep.subr.mxu0 0.0
    %308 = vmatpush1.msra.mxu0 0.0
    %309 = vmatprep.subr.mxu0 0.0
    %310 = vmatpush1.msra.mxu0 0.0
    %311 = vmatprep.subr.mxu0 0.0
    %312 = vmatpush1.msra.mxu0 0.0
    %313 = vmatprep.subr.mxu0 0.0
    %314 = vmatpush1.msra.mxu0 0.0
    %315 = vmatprep.subr.mxu0 0.0
    %316 = vmatpush1.msra.mxu0 0.0
    %317 = vmatprep.subr.mxu0 0.0
    %318 = vmatpush1.msra.mxu0 0.0
    %319 = vmatprep.subr.mxu0 0.0
    %320 = vmatpush1.msra.mxu0 0.0
    %321 = vmatprep.mubr.f32.mxu0 0.0
    %322 = vmatmul.mubr.f32.gmra.mrb[0].mxu0 %v255
    %v323 = vpop.f32.mrb[0].mxu0
    %v324 = vadd.f32 %v253, %v323
    %v325 = vpop.f32.mrb[0].mxu0
    %326 = vdwg.mxu0
    %327 = vst [vmem:[#allocation6] sm:$0x3] %v324
    // Predicated region
    $region18: #{fully_connected_forward.1} parent=1 // pred_check
      _
    $region19: #{fully_connected_forward.1} parent=1 // pred_check_branch
      %329 = sbr.rel (0) target = $region21
    $region20: #{fully_connected_forward.1} parent=1 // pred_region
      %s331 = ssub.s32 32, 32
      %332 = vsyncadd [#allocation4], %s331
      %s334 = sshll.u32 [#allocation5], 4
      %s335 = int_to_ptr.vmem [resolvable:$true] %s334
      %337 = dma.vmem_to_hbm [thread:$0]  %s335, 32, %s3, [#allocation4]
    $region21: #{fully_connected_forward.1} parent=1 // pred_fallthru
      _
    // Predicated region
    $region22: #{fully_connected_forward.1} parent=1 // pred_check
      _
    $region23: #{fully_connected_forward.1} parent=1 // pred_check_branch
      %339 = sbr.rel (0) target = $region25
    $region24: #{fully_connected_forward.1} parent=1 // pred_region
      %s341 = ssub.s32 32, 32
      %342 = vsyncadd [#allocation7], %s341
      %s344 = sshll.u32 [#allocation6], 4
      %s345 = int_to_ptr.vmem [resolvable:$true] %s344
      %347 = dma.vmem_to_hbm [thread:$0]  %s345, 32, %s4, [#allocation7]
    $region25: #{fully_connected_forward.1} parent=1 // pred_fallthru
      _
    // Predicated region
    $region26: #{fully_connected_forward.1} parent=1 // pred_check
      _
    $region27: #{fully_connected_forward.1} parent=1 // pred_check_branch
      %349 = sbr.rel (0) target = $region29
    $region28: #{fully_connected_forward.1} parent=1 // pred_region
      %350 = dma.done [#allocation4], 32
    $region29: #{fully_connected_forward.1} parent=1 // pred_fallthru
      _
    // Predicated region
    $region30: #{fully_connected_forward.1} parent=1 // pred_check
      _
    $region31: #{fully_connected_forward.1} parent=1 // pred_check_branch
      %352 = sbr.rel (0) target = $region33
    $region32: #{fully_connected_forward.1} parent=1 // pred_region
      %353 = dma.done [#allocation7], 32
    $region33: #{fully_connected_forward.1} parent=1 // pred_fallthru
      _
    %354 = vsyncpa [#allocation3], 1
    %355 = vsyncpa [#allocation4], 1
    %356 = vsyncpa [#allocation7], 1

</llo_original>
